<compile_context>
chip_gen: v7x
topology: tpu7x:2x2x1
jax: 0.10.0
libtpu: 0.0.40
codegen_flags: <defaults>
</compile_context>

<pallas_src>
import functools

import jax
import jax.numpy as jnp
import numpy as np
from jax.experimental import pallas as pl
from jax.experimental.pallas import tpu as pltpu

BN_EPS = 1e-5
LRELU_ALPHA = 0.2


def _lrelu(x):
    return jnp.where(x > 0, x, LRELU_ALPHA * x)


def _refine_block_kernel(x_ref, w1_ref, s1_ref, b1_ref, w2_ref, s2_ref, b2_ref,
                         mask_ref, out_ref, *, shifts):
    """One batch element per grid step.

    x_ref   : (1, C, H*W)  f32   flattened C-major input
    w?_ref  : (C, 9*C)     bf16  im2col-fused conv weights (tap-major on K)
    s?/b?   : (C, 1)       f32   folded BatchNorm scale / bias
    mask_ref: (9, 1, H*W)  f32   per-tap validity masks ('same' padding, zero fill)
    out_ref : (1, C, H*W)  f32
    shifts  : static tuple of 9 lane-roll amounts (jnp.roll convention), one per tap
    """
    x = x_ref[0]                                    # (C, HW) f32

    def im2col(a):
        # (C, HW) -> (9*C, HW): each tap is a lane-roll of `a` (XLU) with
        # out-of-image positions zeroed by a precomputed mask (VPU mul).
        cols = []
        for t, s in enumerate(shifts):
            w = a if s == 0 else pltpu.roll(a, s, 1)
            cols.append(w if t == 4 else w * mask_ref[t])   # centre tap needs no mask
        return jnp.concatenate(cols, axis=0).astype(jnp.bfloat16)

    # ---- conv1 (single MXU matmul, K = 9*C) + folded BN + LeakyReLU ----
    acc1 = jnp.dot(w1_ref[...], im2col(x), preferred_element_type=jnp.float32)
    y = _lrelu(acc1 * s1_ref[...] + b1_ref[...])

    # ---- conv2 + folded BN + residual + LeakyReLU (no VMEM round trip for y) ----
    acc2 = jnp.dot(w2_ref[...], im2col(y), preferred_element_type=jnp.float32)
    z = _lrelu(acc2 * s2_ref[...] + b2_ref[...] + x)

    out_ref[0] = z


def _fold_bn(gamma, beta, mean, var, eps=BN_EPS):
    scale = gamma / jnp.sqrt(var + eps)
    bias = beta - mean * scale
    return scale.astype(jnp.float32), bias.astype(jnp.float32)


def refine_basic_block(x_nchw, w1, bn1, w2, bn2):
    """x_nchw: (N, C, H, W) float32.  w?: PyTorch-layout conv weights (Cout, Cin, 3, 3).
    bn?: tuples (gamma, beta, running_mean, running_var) — inference mode."""
    N, C, H, W = x_nchw.shape
    HW = H * W

    # C-major flattened layout; NCHW reshapes to (N, C, H*W) for free (no transpose).
    x_flat = x_nchw.reshape(N, C, HW).astype(jnp.float32)

    # im2col-fused weights: (Cout, Cin, KH, KW) -> (Cout, (kh*3+kw)*C + cin); bf16 for MXU.
    w1m = jnp.transpose(w1, (0, 2, 3, 1)).reshape(C, 9 * C).astype(jnp.bfloat16)
    w2m = jnp.transpose(w2, (0, 2, 3, 1)).reshape(C, 9 * C).astype(jnp.bfloat16)

    s1, b1 = _fold_bn(*bn1)
    s2, b2 = _fold_bn(*bn2)
    s1, b1, s2, b2 = [a.reshape(C, 1) for a in (s1, b1, s2, b2)]

    # Per-tap lane shifts (jnp.roll convention) and validity masks for 'same' padding
    # on the flattened H*W axis. Built once on host with numpy.
    shifts = []
    masks = np.zeros((9, 1, HW), np.float32)
    hh, ww = np.meshgrid(np.arange(H), np.arange(W), indexing="ij")
    for kh in range(3):
        for kw in range(3):
            t = kh * 3 + kw
            d = (kh - 1) * W + (kw - 1)           # flat source offset of this tap
            shifts.append((-d) % HW)              # rolled[p] == a[p + d]
            valid = ((hh + kh - 1 >= 0) & (hh + kh - 1 < H) &
                     (ww + kw - 1 >= 0) & (ww + kw - 1 < W))
            masks[t, 0] = valid.reshape(HW).astype(np.float32)
    masks = jnp.asarray(masks)

    kernel = functools.partial(_refine_block_kernel, shifts=tuple(shifts))

    out_flat = pl.pallas_call(
        kernel,
        out_shape=jax.ShapeDtypeStruct((N, C, HW), jnp.float32),
        grid_spec=pltpu.PrefetchScalarGridSpec(
            num_scalar_prefetch=0,
            grid=(N,),
            in_specs=[
                pl.BlockSpec((1, C, HW), lambda n: (n, 0, 0)),     # x
                pl.BlockSpec((C, 9 * C), lambda n: (0, 0)),        # w1 (im2col, bf16)
                pl.BlockSpec((C, 1), lambda n: (0, 0)),            # bn1 scale
                pl.BlockSpec((C, 1), lambda n: (0, 0)),            # bn1 bias
                pl.BlockSpec((C, 9 * C), lambda n: (0, 0)),        # w2 (im2col, bf16)
                pl.BlockSpec((C, 1), lambda n: (0, 0)),            # bn2 scale
                pl.BlockSpec((C, 1), lambda n: (0, 0)),            # bn2 bias
                pl.BlockSpec((9, 1, HW), lambda n: (0, 0, 0)),     # tap masks
            ],
            out_specs=pl.BlockSpec((1, C, HW), lambda n: (n, 0, 0)),
        ),
        compiler_params=pltpu.CompilerParams(dimension_semantics=("parallel",)),
    )(x_flat, w1m, s1, b1, w2m, s2, b2, masks)

    return out_flat.reshape(N, C, H, W)


# ------------------------- pure-JAX reference (for checking) -------------------------
def _ref_forward(x, w1, bn1, w2, bn2):
    def conv(x, w):
        return jax.lax.conv_general_dilated(
            x, w, window_strides=(1, 1), padding="SAME",
            dimension_numbers=("NCHW", "OIHW", "NCHW"))

    def bn(x, params):
        g, b, m, v = params
        inv = g / jnp.sqrt(v + BN_EPS)
        return (x - m[None, :, None, None]) * inv[None, :, None, None] + b[None, :, None, None]

    out = _lrelu(bn(conv(x, w1), bn1))
    out = bn(conv(out, w2), bn2)
    return _lrelu(out + x)


if __name__ == "__main__":
    key = jax.random.PRNGKey(0)
    k1, k2, kx = jax.random.split(key, 3)

    N, C, H, W = 2, 8, 16, 16   # planes = 8

    x = jax.random.normal(kx, (N, C, H, W), dtype=jnp.float32)
    w1 = 0.1 * jax.random.normal(k1, (C, C, 3, 3), dtype=jnp.float32)   # (Cout, Cin, KH, KW)
    w2 = 0.1 * jax.random.normal(k2, (C, C, 3, 3), dtype=jnp.float32)

    # deterministic BatchNorm parameters / running stats (inference mode)
    idx = jnp.arange(C, dtype=jnp.float32)
    bn1 = (1.0 + 0.05 * idx, 0.02 * idx, 0.01 * idx, 1.0 + 0.1 * idx)
    bn2 = (1.0 - 0.03 * idx, -0.01 * idx, -0.02 * idx, 1.0 + 0.05 * idx)

    out = refine_basic_block(x, w1, bn1, w2, bn2)
    out = jax.block_until_ready(out)

    ref = _ref_forward(x, w1, bn1, w2, bn2)
    # bf16 MXU operands (f32 accumulation) -> slightly looser tolerance than pure f32.
    np.testing.assert_allclose(np.asarray(out), np.asarray(ref), rtol=2e-2, atol=2e-2)

    print("KERNEL_OK")
</pallas_src>

<mosaic_0001>
module attributes {stable_mosaic.version = 11 : i64} {
  func.func @_refine_block_kernel(%arg0: i32, %arg1: memref<1x8x256xf32, #tpu.memory_space<vmem>>, %arg2: memref<8x72xbf16, #tpu.memory_space<vmem>>, %arg3: memref<8x1xf32, #tpu.memory_space<vmem>>, %arg4: memref<8x1xf32, #tpu.memory_space<vmem>>, %arg5: memref<8x72xbf16, #tpu.memory_space<vmem>>, %arg6: memref<8x1xf32, #tpu.memory_space<vmem>>, %arg7: memref<8x1xf32, #tpu.memory_space<vmem>>, %arg8: memref<9x1x256xf32, #tpu.memory_space<vmem>>, %arg9: memref<1x8x256xf32, #tpu.memory_space<vmem>>) attributes {dimension_semantics = [#tpu.dimension_semantics<parallel>], iteration_bounds = array<i64: 2>, scalar_prefetch = 0 : i64, scratch_operands = 0 : i64, tpu.core_type = #tpu.core_type<tc>, window_params = [{transform_indices = @transform_0, window_bounds = array<i64: 1, 8, 256>}, {pipeline_mode = #tpu.pipeline_mode<synchronous>, transform_indices = @transform_1, window_bounds = array<i64: 8, 72>}, {pipeline_mode = #tpu.pipeline_mode<synchronous>, transform_indices = @transform_2, window_bounds = array<i64: 8, 1>}, {pipeline_mode = #tpu.pipeline_mode<synchronous>, transform_indices = @transform_3, window_bounds = array<i64: 8, 1>}, {pipeline_mode = #tpu.pipeline_mode<synchronous>, transform_indices = @transform_4, window_bounds = array<i64: 8, 72>}, {pipeline_mode = #tpu.pipeline_mode<synchronous>, transform_indices = @transform_5, window_bounds = array<i64: 8, 1>}, {pipeline_mode = #tpu.pipeline_mode<synchronous>, transform_indices = @transform_6, window_bounds = array<i64: 8, 1>}, {pipeline_mode = #tpu.pipeline_mode<synchronous>, transform_indices = @transform_7, window_bounds = array<i64: 9, 1, 256>}, {transform_indices = @transform_8, window_bounds = array<i64: 1, 8, 256>}]} {
    %c0 = arith.constant 0 : index
    %c0_0 = arith.constant 0 : index
    %c0_1 = arith.constant 0 : index
    %0 = vector.load %arg1[%c0, %c0_0, %c0_1] : memref<1x8x256xf32, #tpu.memory_space<vmem>>, vector<1x8x256xf32>
    %1 = vector.shape_cast %0 : vector<1x8x256xf32> to vector<8x256xf32>
    %c0_2 = arith.constant 0 : index
    %c0_3 = arith.constant 0 : index
    %2 = vector.load %arg2[%c0_2, %c0_3] : memref<8x72xbf16, #tpu.memory_space<vmem>>, vector<8x72xbf16>
    %c17_i32 = arith.constant 17 : i32
    %3 = tpu.dynamic_rotate %1 by %c17_i32 dim 1 : vector<8x256xf32>, i32 -> vector<8x256xf32>
    %c0_4 = arith.constant 0 : index
    %c0_5 = arith.constant 0 : index
    %c0_6 = arith.constant 0 : index
    %4 = vector.load %arg8[%c0_4, %c0_5, %c0_6] : memref<9x1x256xf32, #tpu.memory_space<vmem>>, vector<1x1x256xf32>
    %5 = vector.shape_cast %4 : vector<1x1x256xf32> to vector<1x256xf32>
    %6 = vector.broadcast %5 : vector<1x256xf32> to vector<8x256xf32>
    %7 = arith.mulf %3, %6 : vector<8x256xf32>
    %c16_i32 = arith.constant 16 : i32
    %8 = tpu.dynamic_rotate %1 by %c16_i32 dim 1 : vector<8x256xf32>, i32 -> vector<8x256xf32>
    %c1 = arith.constant 1 : index
    %c0_7 = arith.constant 0 : index
    %c0_8 = arith.constant 0 : index
    %9 = vector.load %arg8[%c1, %c0_7, %c0_8] : memref<9x1x256xf32, #tpu.memory_space<vmem>>, vector<1x1x256xf32>
    %10 = vector.shape_cast %9 : vector<1x1x256xf32> to vector<1x256xf32>
    %11 = vector.broadcast %10 : vector<1x256xf32> to vector<8x256xf32>
    %12 = arith.mulf %8, %11 : vector<8x256xf32>
    %c15_i32 = arith.constant 15 : i32
    %13 = tpu.dynamic_rotate %1 by %c15_i32 dim 1 : vector<8x256xf32>, i32 -> vector<8x256xf32>
    %c2 = arith.constant 2 : index
    %c0_9 = arith.constant 0 : index
    %c0_10 = arith.constant 0 : index
    %14 = vector.load %arg8[%c2, %c0_9, %c0_10] : memref<9x1x256xf32, #tpu.memory_space<vmem>>, vector<1x1x256xf32>
    %15 = vector.shape_cast %14 : vector<1x1x256xf32> to vector<1x256xf32>
    %16 = vector.broadcast %15 : vector<1x256xf32> to vector<8x256xf32>
    %17 = arith.mulf %13, %16 : vector<8x256xf32>
    %c1_i32 = arith.constant 1 : i32
    %18 = tpu.dynamic_rotate %1 by %c1_i32 dim 1 : vector<8x256xf32>, i32 -> vector<8x256xf32>
    %c3 = arith.constant 3 : index
    %c0_11 = arith.constant 0 : index
    %c0_12 = arith.constant 0 : index
    %19 = vector.load %arg8[%c3, %c0_11, %c0_12] : memref<9x1x256xf32, #tpu.memory_space<vmem>>, vector<1x1x256xf32>
    %20 = vector.shape_cast %19 : vector<1x1x256xf32> to vector<1x256xf32>
    %21 = vector.broadcast %20 : vector<1x256xf32> to vector<8x256xf32>
    %22 = arith.mulf %18, %21 : vector<8x256xf32>
    %c255_i32 = arith.constant 255 : i32
    %23 = tpu.dynamic_rotate %1 by %c255_i32 dim 1 : vector<8x256xf32>, i32 -> vector<8x256xf32>
    %c5 = arith.constant 5 : index
    %c0_13 = arith.constant 0 : index
    %c0_14 = arith.constant 0 : index
    %24 = vector.load %arg8[%c5, %c0_13, %c0_14] : memref<9x1x256xf32, #tpu.memory_space<vmem>>, vector<1x1x256xf32>
    %25 = vector.shape_cast %24 : vector<1x1x256xf32> to vector<1x256xf32>
    %26 = vector.broadcast %25 : vector<1x256xf32> to vector<8x256xf32>
    %27 = arith.mulf %23, %26 : vector<8x256xf32>
    %c241_i32 = arith.constant 241 : i32
    %28 = tpu.dynamic_rotate %1 by %c241_i32 dim 1 : vector<8x256xf32>, i32 -> vector<8x256xf32>
    %c6 = arith.constant 6 : index
    %c0_15 = arith.constant 0 : index
    %c0_16 = arith.constant 0 : index
    %29 = vector.load %arg8[%c6, %c0_15, %c0_16] : memref<9x1x256xf32, #tpu.memory_space<vmem>>, vector<1x1x256xf32>
    %30 = vector.shape_cast %29 : vector<1x1x256xf32> to vector<1x256xf32>
    %31 = vector.broadcast %30 : vector<1x256xf32> to vector<8x256xf32>
    %32 = arith.mulf %28, %31 : vector<8x256xf32>
    %c240_i32 = arith.constant 240 : i32
    %33 = tpu.dynamic_rotate %1 by %c240_i32 dim 1 : vector<8x256xf32>, i32 -> vector<8x256xf32>
    %c7 = arith.constant 7 : index
    %c0_17 = arith.constant 0 : index
    %c0_18 = arith.constant 0 : index
    %34 = vector.load %arg8[%c7, %c0_17, %c0_18] : memref<9x1x256xf32, #tpu.memory_space<vmem>>, vector<1x1x256xf32>
    %35 = vector.shape_cast %34 : vector<1x1x256xf32> to vector<1x256xf32>
    %36 = vector.broadcast %35 : vector<1x256xf32> to vector<8x256xf32>
    %37 = arith.mulf %33, %36 : vector<8x256xf32>
    %c239_i32 = arith.constant 239 : i32
    %38 = tpu.dynamic_rotate %1 by %c239_i32 dim 1 : vector<8x256xf32>, i32 -> vector<8x256xf32>
    %c8 = arith.constant 8 : index
    %c0_19 = arith.constant 0 : index
    %c0_20 = arith.constant 0 : index
    %39 = vector.load %arg8[%c8, %c0_19, %c0_20] : memref<9x1x256xf32, #tpu.memory_space<vmem>>, vector<1x1x256xf32>
    %40 = vector.shape_cast %39 : vector<1x1x256xf32> to vector<1x256xf32>
    %41 = vector.broadcast %40 : vector<1x256xf32> to vector<8x256xf32>
    %42 = arith.mulf %38, %41 : vector<8x256xf32>
    %43 = tpu.concatenate %7, %12, %17, %22, %1, %27, %32, %37, %42 in 0 : vector<8x256xf32>, vector<8x256xf32>, vector<8x256xf32>, vector<8x256xf32>, vector<8x256xf32>, vector<8x256xf32>, vector<8x256xf32>, vector<8x256xf32>, vector<8x256xf32> -> vector<72x256xf32>
    %44 = arith.truncf %43 : vector<72x256xf32> to vector<72x256xbf16>
    %cst = arith.constant dense<0.000000e+00> : vector<8x256xf32>
    %45 = tpu.matmul %2, %44, %cst {dimension_numbers = #tpu.dot_dimension_numbers<[1], [0], [0], [1], [0, 0, 1, 1], [], []>} : vector<8x72xbf16>, vector<72x256xbf16>, vector<8x256xf32> -> vector<8x256xf32>
    %c0_21 = arith.constant 0 : index
    %c0_22 = arith.constant 0 : index
    %46 = vector.load %arg3[%c0_21, %c0_22] : memref<8x1xf32, #tpu.memory_space<vmem>>, vector<8x1xf32>
    %47 = vector.broadcast %46 : vector<8x1xf32> to vector<8x256xf32>
    %48 = arith.mulf %45, %47 : vector<8x256xf32>
    %c0_23 = arith.constant 0 : index
    %c0_24 = arith.constant 0 : index
    %49 = vector.load %arg4[%c0_23, %c0_24] : memref<8x1xf32, #tpu.memory_space<vmem>>, vector<8x1xf32>
    %50 = vector.broadcast %49 : vector<8x1xf32> to vector<8x256xf32>
    %51 = arith.addf %48, %50 : vector<8x256xf32>
    %cst_25 = arith.constant 0.000000e+00 : f32
    %52 = vector.broadcast %cst_25 : f32 to vector<8x256xf32>
    %53 = arith.cmpf ogt, %51, %52 : vector<8x256xf32>
    %cst_26 = arith.constant 2.000000e-01 : f32
    %54 = vector.broadcast %cst_26 : f32 to vector<8x256xf32>
    %55 = arith.mulf %54, %51 : vector<8x256xf32>
    %56 = arith.select %53, %51, %55 : vector<8x256xi1>, vector<8x256xf32>
    %c0_27 = arith.constant 0 : index
    %c0_28 = arith.constant 0 : index
    %57 = vector.load %arg5[%c0_27, %c0_28] : memref<8x72xbf16, #tpu.memory_space<vmem>>, vector<8x72xbf16>
    %c17_i32_29 = arith.constant 17 : i32
    %58 = tpu.dynamic_rotate %56 by %c17_i32_29 dim 1 : vector<8x256xf32>, i32 -> vector<8x256xf32>
    %c0_30 = arith.constant 0 : index
    %c0_31 = arith.constant 0 : index
    %c0_32 = arith.constant 0 : index
    %59 = vector.load %arg8[%c0_30, %c0_31, %c0_32] : memref<9x1x256xf32, #tpu.memory_space<vmem>>, vector<1x1x256xf32>
    %60 = vector.shape_cast %59 : vector<1x1x256xf32> to vector<1x256xf32>
    %61 = vector.broadcast %60 : vector<1x256xf32> to vector<8x256xf32>
    %62 = arith.mulf %58, %61 : vector<8x256xf32>
    %c16_i32_33 = arith.constant 16 : i32
    %63 = tpu.dynamic_rotate %56 by %c16_i32_33 dim 1 : vector<8x256xf32>, i32 -> vector<8x256xf32>
    %c1_34 = arith.constant 1 : index
    %c0_35 = arith.constant 0 : index
    %c0_36 = arith.constant 0 : index
    %64 = vector.load %arg8[%c1_34, %c0_35, %c0_36] : memref<9x1x256xf32, #tpu.memory_space<vmem>>, vector<1x1x256xf32>
    %65 = vector.shape_cast %64 : vector<1x1x256xf32> to vector<1x256xf32>
    %66 = vector.broadcast %65 : vector<1x256xf32> to vector<8x256xf32>
    %67 = arith.mulf %63, %66 : vector<8x256xf32>
    %c15_i32_37 = arith.constant 15 : i32
    %68 = tpu.dynamic_rotate %56 by %c15_i32_37 dim 1 : vector<8x256xf32>, i32 -> vector<8x256xf32>
    %c2_38 = arith.constant 2 : index
    %c0_39 = arith.constant 0 : index
    %c0_40 = arith.constant 0 : index
    %69 = vector.load %arg8[%c2_38, %c0_39, %c0_40] : memref<9x1x256xf32, #tpu.memory_space<vmem>>, vector<1x1x256xf32>
    %70 = vector.shape_cast %69 : vector<1x1x256xf32> to vector<1x256xf32>
    %71 = vector.broadcast %70 : vector<1x256xf32> to vector<8x256xf32>
    %72 = arith.mulf %68, %71 : vector<8x256xf32>
    %c1_i32_41 = arith.constant 1 : i32
    %73 = tpu.dynamic_rotate %56 by %c1_i32_41 dim 1 : vector<8x256xf32>, i32 -> vector<8x256xf32>
    %c3_42 = arith.constant 3 : index
    %c0_43 = arith.constant 0 : index
    %c0_44 = arith.constant 0 : index
    %74 = vector.load %arg8[%c3_42, %c0_43, %c0_44] : memref<9x1x256xf32, #tpu.memory_space<vmem>>, vector<1x1x256xf32>
    %75 = vector.shape_cast %74 : vector<1x1x256xf32> to vector<1x256xf32>
    %76 = vector.broadcast %75 : vector<1x256xf32> to vector<8x256xf32>
    %77 = arith.mulf %73, %76 : vector<8x256xf32>
    %c255_i32_45 = arith.constant 255 : i32
    %78 = tpu.dynamic_rotate %56 by %c255_i32_45 dim 1 : vector<8x256xf32>, i32 -> vector<8x256xf32>
    %c5_46 = arith.constant 5 : index
    %c0_47 = arith.constant 0 : index
    %c0_48 = arith.constant 0 : index
    %79 = vector.load %arg8[%c5_46, %c0_47, %c0_48] : memref<9x1x256xf32, #tpu.memory_space<vmem>>, vector<1x1x256xf32>
    %80 = vector.shape_cast %79 : vector<1x1x256xf32> to vector<1x256xf32>
    %81 = vector.broadcast %80 : vector<1x256xf32> to vector<8x256xf32>
    %82 = arith.mulf %78, %81 : vector<8x256xf32>
    %c241_i32_49 = arith.constant 241 : i32
    %83 = tpu.dynamic_rotate %56 by %c241_i32_49 dim 1 : vector<8x256xf32>, i32 -> vector<8x256xf32>
    %c6_50 = arith.constant 6 : index
    %c0_51 = arith.constant 0 : index
    %c0_52 = arith.constant 0 : index
    %84 = vector.load %arg8[%c6_50, %c0_51, %c0_52] : memref<9x1x256xf32, #tpu.memory_space<vmem>>, vector<1x1x256xf32>
    %85 = vector.shape_cast %84 : vector<1x1x256xf32> to vector<1x256xf32>
    %86 = vector.broadcast %85 : vector<1x256xf32> to vector<8x256xf32>
    %87 = arith.mulf %83, %86 : vector<8x256xf32>
    %c240_i32_53 = arith.constant 240 : i32
    %88 = tpu.dynamic_rotate %56 by %c240_i32_53 dim 1 : vector<8x256xf32>, i32 -> vector<8x256xf32>
    %c7_54 = arith.constant 7 : index
    %c0_55 = arith.constant 0 : index
    %c0_56 = arith.constant 0 : index
    %89 = vector.load %arg8[%c7_54, %c0_55, %c0_56] : memref<9x1x256xf32, #tpu.memory_space<vmem>>, vector<1x1x256xf32>
    %90 = vector.shape_cast %89 : vector<1x1x256xf32> to vector<1x256xf32>
    %91 = vector.broadcast %90 : vector<1x256xf32> to vector<8x256xf32>
    %92 = arith.mulf %88, %91 : vector<8x256xf32>
    %c239_i32_57 = arith.constant 239 : i32
    %93 = tpu.dynamic_rotate %56 by %c239_i32_57 dim 1 : vector<8x256xf32>, i32 -> vector<8x256xf32>
    %c8_58 = arith.constant 8 : index
    %c0_59 = arith.constant 0 : index
    %c0_60 = arith.constant 0 : index
    %94 = vector.load %arg8[%c8_58, %c0_59, %c0_60] : memref<9x1x256xf32, #tpu.memory_space<vmem>>, vector<1x1x256xf32>
    %95 = vector.shape_cast %94 : vector<1x1x256xf32> to vector<1x256xf32>
    %96 = vector.broadcast %95 : vector<1x256xf32> to vector<8x256xf32>
    %97 = arith.mulf %93, %96 : vector<8x256xf32>
    %98 = tpu.concatenate %62, %67, %72, %77, %56, %82, %87, %92, %97 in 0 : vector<8x256xf32>, vector<8x256xf32>, vector<8x256xf32>, vector<8x256xf32>, vector<8x256xf32>, vector<8x256xf32>, vector<8x256xf32>, vector<8x256xf32>, vector<8x256xf32> -> vector<72x256xf32>
    %99 = arith.truncf %98 : vector<72x256xf32> to vector<72x256xbf16>
    %cst_61 = arith.constant dense<0.000000e+00> : vector<8x256xf32>
    %100 = tpu.matmul %57, %99, %cst_61 {dimension_numbers = #tpu.dot_dimension_numbers<[1], [0], [0], [1], [0, 0, 1, 1], [], []>} : vector<8x72xbf16>, vector<72x256xbf16>, vector<8x256xf32> -> vector<8x256xf32>
    %c0_62 = arith.constant 0 : index
    %c0_63 = arith.constant 0 : index
    %101 = vector.load %arg6[%c0_62, %c0_63] : memref<8x1xf32, #tpu.memory_space<vmem>>, vector<8x1xf32>
    %102 = vector.broadcast %101 : vector<8x1xf32> to vector<8x256xf32>
    %103 = arith.mulf %100, %102 : vector<8x256xf32>
    %c0_64 = arith.constant 0 : index
    %c0_65 = arith.constant 0 : index
    %104 = vector.load %arg7[%c0_64, %c0_65] : memref<8x1xf32, #tpu.memory_space<vmem>>, vector<8x1xf32>
    %105 = vector.broadcast %104 : vector<8x1xf32> to vector<8x256xf32>
    %106 = arith.addf %103, %105 : vector<8x256xf32>
    %107 = arith.addf %106, %1 : vector<8x256xf32>
    %cst_66 = arith.constant 0.000000e+00 : f32
    %108 = vector.broadcast %cst_66 : f32 to vector<8x256xf32>
    %109 = arith.cmpf ogt, %107, %108 : vector<8x256xf32>
    %cst_67 = arith.constant 2.000000e-01 : f32
    %110 = vector.broadcast %cst_67 : f32 to vector<8x256xf32>
    %111 = arith.mulf %110, %107 : vector<8x256xf32>
    %112 = arith.select %109, %107, %111 : vector<8x256xi1>, vector<8x256xf32>
    %c0_68 = arith.constant 0 : index
    %c0_69 = arith.constant 0 : index
    %c0_70 = arith.constant 0 : index
    %113 = vector.load %arg9[%c0_68, %c0_69, %c0_70] : memref<1x8x256xf32, #tpu.memory_space<vmem>>, vector<1x8x256xf32>
    %114 = vector.shape_cast %113 : vector<1x8x256xf32> to vector<8x256xf32>
    %115 = vector.shape_cast %112 : vector<8x256xf32> to vector<1x8x256xf32>
    tpu.vector_store %arg9[%c0_68, %c0_69, %c0_70], %115 {strides = array<i32>} : memref<1x8x256xf32, #tpu.memory_space<vmem>>, vector<1x8x256xf32>,
    return
  }
  func.func @transform_0(%arg0: i32) -> (i32, i32, i32) {
    %c0_i32 = arith.constant 0 : i32
    %c0_i32_0 = arith.constant 0 : i32
    %c0_i32_1 = arith.constant 0 : i32
    return %arg0, %c0_i32, %c0_i32_0 : i32, i32, i32
  }
  func.func @transform_1(%arg0: i32) -> (i32, i32) {
    %c0_i32 = arith.constant 0 : i32
    %c0_i32_0 = arith.constant 0 : i32
    %c0_i32_1 = arith.constant 0 : i32
    return %c0_i32, %c0_i32_0 : i32, i32
  }
  func.func @transform_2(%arg0: i32) -> (i32, i32) {
    %c0_i32 = arith.constant 0 : i32
    %c0_i32_0 = arith.constant 0 : i32
    %c0_i32_1 = arith.constant 0 : i32
    return %c0_i32, %c0_i32_0 : i32, i32
  }
  func.func @transform_3(%arg0: i32) -> (i32, i32) {
    %c0_i32 = arith.constant 0 : i32
    %c0_i32_0 = arith.constant 0 : i32
    %c0_i32_1 = arith.constant 0 : i32
    return %c0_i32, %c0_i32_0 : i32, i32
  }
  func.func @transform_4(%arg0: i32) -> (i32, i32) {
    %c0_i32 = arith.constant 0 : i32
    %c0_i32_0 = arith.constant 0 : i32
    %c0_i32_1 = arith.constant 0 : i32
    return %c0_i32, %c0_i32_0 : i32, i32
  }
  func.func @transform_5(%arg0: i32) -> (i32, i32) {
    %c0_i32 = arith.constant 0 : i32
    %c0_i32_0 = arith.constant 0 : i32
    %c0_i32_1 = arith.constant 0 : i32
    return %c0_i32, %c0_i32_0 : i32, i32
  }
  func.func @transform_6(%arg0: i32) -> (i32, i32) {
    %c0_i32 = arith.constant 0 : i32
    %c0_i32_0 = arith.constant 0 : i32
    %c0_i32_1 = arith.constant 0 : i32
    return %c0_i32, %c0_i32_0 : i32, i32
  }
  func.func @transform_7(%arg0: i32) -> (i32, i32, i32) {
    %c0_i32 = arith.constant 0 : i32
    %c0_i32_0 = arith.constant 0 : i32
    %c0_i32_1 = arith.constant 0 : i32
    %c0_i32_2 = arith.constant 0 : i32
    return %c0_i32, %c0_i32_0, %c0_i32_1 : i32, i32, i32
  }
  func.func @transform_8(%arg0: i32) -> (i32, i32, i32) {
    %c0_i32 = arith.constant 0 : i32
    %c0_i32_0 = arith.constant 0 : i32
    %c0_i32_1 = arith.constant 0 : i32
    return %arg0, %c0_i32, %c0_i32_0 : i32, i32, i32
  }
}

</mosaic_0001>

<llo_original>
// kernel: tpu_custom_call.1
$region0: #{tpu_custom_call.1}
  #allocation0 [shape = 'u32[]', space=smem, size = 0x4, offset = 0x4, fixed_abs, tag = 'smem constant byte address 0x4 - core index']
  #allocation1 [shape = 'u32[144,128]{1,0:T(1,128)}', space=vmem, size = 0x12000, scoped, tag = 'internal scratch']
  %s0 = inlined_call_operand.vmem [shape: f32[2,8,256], index: 0, kind: input, shape index: {}]
  %s1 = inlined_call_operand.hbm [shape: bf16[8,72], index: 1, kind: input, shape index: {}]
  %s2 = inlined_call_operand.vmem [shape: f32[8,1], index: 2, kind: input, shape index: {}]
  %s3 = inlined_call_operand.vmem [shape: f32[8,1], index: 3, kind: input, shape index: {}]
  %s4 = inlined_call_operand.hbm [shape: bf16[8,72], index: 4, kind: input, shape index: {}]
  %s5 = inlined_call_operand.vmem [shape: f32[8,1], index: 5, kind: input, shape index: {}]
  %s6 = inlined_call_operand.vmem [shape: f32[8,1], index: 6, kind: input, shape index: {}]
  %s7 = inlined_call_operand.vmem [shape: f32[9,1,256], index: 7, kind: input, shape index: {}]
  %s8 = inlined_call_operand.hbm [shape: f32[2,8,256], index: 8, kind: output, shape index: {}]
  %s9 = sld [smem:[#allocation0]]
  $region73: #{tpu_custom_call.1} parent=0
    _
  %s11 = ssub.s32 1, %s9
  %s12 = scalar_select 0, %s11, %s9
  $region1: #{tpu_custom_call.1} parent=0
    #allocation2 [shape = 'u8[2048]{0}', space=vmem, size = 0x800, scoped, tag = 'input window, operand 1, single buffered']
    #allocation3 [shape = 's32[2]{0}', space=sflag, size = 0x8, scoped, tag = 'scoped memory for tpu_custom_call.1']
    #allocation4 [shape = 's32[2]{0}', space=sflag, size = 0x8, scoped, tag = 'scoped memory for tpu_custom_call.1']
    #allocation5 [shape = 'u8[2048]{0}', space=vmem, size = 0x800, scoped, tag = 'input window, operand 4, single buffered']
    #allocation6 [shape = 's32[1]{0}', space=sflag, size = 0x4, scoped, tag = 'scoped memory for tpu_custom_call.1']
    #allocation7 [shape = 'u8[16384]{0}', space=vmem, size = 0x4000, scoped, tag = 'output window, operand 0']
    %13 = vsyncpa [#allocation3], 0
    %14 = vsyncpa [#allocation6], 0
    %15 = vsyncpa [#allocation4], 0
    %s16 = scalar_lea.sflag [#allocation4], 1
    %17 = vsyncpa %s16, 0
    loop: start=0, step=1, limit=4
    $region2: #{tpu_custom_call.1} parent=1 // loop_pre_header
      _
    $region3: #{tpu_custom_call.1} parent=1 // loop_header
      %s19 = sphi 0, %s23
      %p20 = scmp.ge.s32.totalorder %s19, 4
      %s29 = sphi 0, %s31
      %s32 = sphi 0, %s29
      %s33 = sphi 0, %s32
      %s49 = sphi 0, %s33
      %s53 = sphi 0, %s53
      %s55 = sphi 0, %s53
      %s56 = sphi 0, %s55
      %s70 = sphi 0, %s56
      %s74 = sphi 0, %s74
      %s76 = sphi 0, %s74
      %s77 = sphi 0, %s76
      %s91 = sphi 0, %s77
      %s95 = sphi 0, %s95
      %s97 = sphi 0, %s95
      %s98 = sphi 0, %s97
      %s112 = sphi 0, %s98
      %s116 = sphi 0, %s116
      %s118 = sphi 0, %s116
      %s119 = sphi 0, %s118
      %s133 = sphi 0, %s119
      %s137 = sphi 0, %s137
      %s139 = sphi 0, %s137
      %s140 = sphi 0, %s139
      %s154 = sphi 0, %s140
      %s158 = sphi 0, %s158
      %s160 = sphi 0, %s158
      %s161 = sphi 0, %s160
      %s175 = sphi 0, %s161
      %s179 = sphi 0, %s179
      %s181 = sphi 0, %s179
      %s182 = sphi 0, %s181
      %s196 = sphi 0, %s182
      %s202 = sphi 0, %s204
      %s205 = sphi 0, %s202
      %s206 = sphi 0, %s205
      %s222 = sphi 0, %s206
    $region4: #{tpu_custom_call.1} parent=1 // loop_header_branch
      %22 = sbr.rel (%p20) target = $region8
    $region5: #{tpu_custom_call.1} parent=1 // loop_body
      %s24 = ssub.s32 %s19, 1
      %s25 = ssub.s32 %s19, 2
      %s26 = sadd.s32 %s19, 1
      %s27 = ssub.s32 %s19, %s26
      %p28 = scmp.eq.s32.totalorder %s27, 0
      %s30 = sadd.s32 %s29, 1
      %s31 = scalar_select %p28, %s29, %s30
      %p34 = pneg %p28
      %p35 = scmp.eq.s32.totalorder %s19, 1
      %p36 = por %p34, %p35
      %p37 = scmp.ne.s32.totalorder %s29, %s32
      %p38 = scmp.eq.s32.totalorder %s19, 0
      %p39 = por %p37, %p38
      %p40 = scmp.ne.s32.totalorder %s29, %s32
      %p41 = scmp.eq.s32.totalorder %s24, 1
      %p42 = por %p40, %p41
      %p43 = scmp.ne.s32.totalorder %s32, %s33
      %p44 = scmp.eq.s32.totalorder %s24, 0
      %p45 = por %p43, %p44
      %p46 = scmp.ne.s32.totalorder %s32, %s33
      %p47 = scmp.eq.s32.totalorder %s25, 1
      %p48 = por %p46, %p47
      %p50 = scmp.ne.s32.totalorder %s33, %s49
      %p51 = scmp.eq.s32.totalorder %s25, 0
      %p52 = por %p50, %p51
      %s54 = sadd.s32 %s53, 1
      %p57 = scmp.eq.s32.totalorder %s19, 1
      %p58 = scmp.ne.s32.totalorder %s53, %s55
      %p59 = scmp.eq.s32.totalorder %s19, 0
      %p60 = por %p58, %p59
      %p61 = scmp.ne.s32.totalorder %s53, %s55
      %p62 = scmp.eq.s32.totalorder %s24, 1
      %p63 = por %p61, %p62
      %p64 = scmp.ne.s32.totalorder %s55, %s56
      %p65 = scmp.eq.s32.totalorder %s24, 0
      %p66 = por %p64, %p65
      %p67 = scmp.ne.s32.totalorder %s55, %s56
      %p68 = scmp.eq.s32.totalorder %s25, 1
      %p69 = por %p67, %p68
      %p71 = scmp.ne.s32.totalorder %s56, %s70
      %p72 = scmp.eq.s32.totalorder %s25, 0
      %p73 = por %p71, %p72
      %s75 = sadd.s32 %s74, 1
      %p78 = scmp.eq.s32.totalorder %s19, 1
      %p79 = scmp.ne.s32.totalorder %s74, %s76
      %p80 = scmp.eq.s32.totalorder %s19, 0
      %p81 = por %p79, %p80
      %p82 = scmp.ne.s32.totalorder %s74, %s76
      %p83 = scmp.eq.s32.totalorder %s24, 1
      %p84 = por %p82, %p83
      %p85 = scmp.ne.s32.totalorder %s76, %s77
      %p86 = scmp.eq.s32.totalorder %s24, 0
      %p87 = por %p85, %p86
      %p88 = scmp.ne.s32.totalorder %s76, %s77
      %p89 = scmp.eq.s32.totalorder %s25, 1
      %p90 = por %p88, %p89
      %p92 = scmp.ne.s32.totalorder %s77, %s91
      %p93 = scmp.eq.s32.totalorder %s25, 0
      %p94 = por %p92, %p93
      %s96 = sadd.s32 %s95, 1
      %p99 = scmp.eq.s32.totalorder %s19, 1
      %p100 = scmp.ne.s32.totalorder %s95, %s97
      %p101 = scmp.eq.s32.totalorder %s19, 0
      %p102 = por %p100, %p101
      %p103 = scmp.ne.s32.totalorder %s95, %s97
      %p104 = scmp.eq.s32.totalorder %s24, 1
      %p105 = por %p103, %p104
      %p106 = scmp.ne.s32.totalorder %s97, %s98
      %p107 = scmp.eq.s32.totalorder %s24, 0
      %p108 = por %p106, %p107
      %p109 = scmp.ne.s32.totalorder %s97, %s98
      %p110 = scmp.eq.s32.totalorder %s25, 1
      %p111 = por %p109, %p110
      %p113 = scmp.ne.s32.totalorder %s98, %s112
      %p114 = scmp.eq.s32.totalorder %s25, 0
      %p115 = por %p113, %p114
      %s117 = sadd.s32 %s116, 1
      %p120 = scmp.eq.s32.totalorder %s19, 1
      %p121 = scmp.ne.s32.totalorder %s116, %s118
      %p122 = scmp.eq.s32.totalorder %s19, 0
      %p123 = por %p121, %p122
      %p124 = scmp.ne.s32.totalorder %s116, %s118
      %p125 = scmp.eq.s32.totalorder %s24, 1
      %p126 = por %p124, %p125
      %p127 = scmp.ne.s32.totalorder %s118, %s119
      %p128 = scmp.eq.s32.totalorder %s24, 0
      %p129 = por %p127, %p128
      %p130 = scmp.ne.s32.totalorder %s118, %s119
      %p131 = scmp.eq.s32.totalorder %s25, 1
      %p132 = por %p130, %p131
      %p134 = scmp.ne.s32.totalorder %s119, %s133
      %p135 = scmp.eq.s32.totalorder %s25, 0
      %p136 = por %p134, %p135
      %s138 = sadd.s32 %s137, 1
      %p141 = scmp.eq.s32.totalorder %s19, 1
      %p142 = scmp.ne.s32.totalorder %s137, %s139
      %p143 = scmp.eq.s32.totalorder %s19, 0
      %p144 = por %p142, %p143
      %p145 = scmp.ne.s32.totalorder %s137, %s139
      %p146 = scmp.eq.s32.totalorder %s24, 1
      %p147 = por %p145, %p146
      %p148 = scmp.ne.s32.totalorder %s139, %s140
      %p149 = scmp.eq.s32.totalorder %s24, 0
      %p150 = por %p148, %p149
      %p151 = scmp.ne.s32.totalorder %s139, %s140
      %p152 = scmp.eq.s32.totalorder %s25, 1
      %p153 = por %p151, %p152
      %p155 = scmp.ne.s32.totalorder %s140, %s154
      %p156 = scmp.eq.s32.totalorder %s25, 0
      %p157 = por %p155, %p156
      %s159 = sadd.s32 %s158, 1
      %p162 = scmp.eq.s32.totalorder %s19, 1
      %p163 = scmp.ne.s32.totalorder %s158, %s160
      %p164 = scmp.eq.s32.totalorder %s19, 0
      %p165 = por %p163, %p164
      %p166 = scmp.ne.s32.totalorder %s158, %s160
      %p167 = scmp.eq.s32.totalorder %s24, 1
      %p168 = por %p166, %p167
      %p169 = scmp.ne.s32.totalorder %s160, %s161
      %p170 = scmp.eq.s32.totalorder %s24, 0
      %p171 = por %p169, %p170
      %p172 = scmp.ne.s32.totalorder %s160, %s161
      %p173 = scmp.eq.s32.totalorder %s25, 1
      %p174 = por %p172, %p173
      %p176 = scmp.ne.s32.totalorder %s161, %s175
      %p177 = scmp.eq.s32.totalorder %s25, 0
      %p178 = por %p176, %p177
      %s180 = sadd.s32 %s179, 1
      %p183 = scmp.eq.s32.totalorder %s19, 1
      %p184 = scmp.ne.s32.totalorder %s179, %s181
      %p185 = scmp.eq.s32.totalorder %s19, 0
      %p186 = por %p184, %p185
      %p187 = scmp.ne.s32.totalorder %s179, %s181
      %p188 = scmp.eq.s32.totalorder %s24, 1
      %p189 = por %p187, %p188
      %p190 = scmp.ne.s32.totalorder %s181, %s182
      %p191 = scmp.eq.s32.totalorder %s24, 0
      %p192 = por %p190, %p191
      %p193 = scmp.ne.s32.totalorder %s181, %s182
      %p194 = scmp.eq.s32.totalorder %s25, 1
      %p195 = por %p193, %p194
      %p197 = scmp.ne.s32.totalorder %s182, %s196
      %p198 = scmp.eq.s32.totalorder %s25, 0
      %p199 = por %p197, %p198
      %s200 = ssub.s32 %s19, %s26
      %p201 = scmp.eq.s32.totalorder %s200, 0
      %s203 = sadd.s32 %s202, 1
      %s204 = scalar_select %p201, %s202, %s203
      %p207 = pneg %p201
      %p208 = scmp.eq.s32.totalorder %s19, 1
      %p209 = por %p207, %p208
      %p210 = scmp.ne.s32.totalorder %s202, %s205
      %p211 = scmp.eq.s32.totalorder %s19, 0
      %p212 = por %p210, %p211
      %p213 = scmp.ne.s32.totalorder %s202, %s205
      %p214 = scmp.eq.s32.totalorder %s24, 1
      %p215 = por %p213, %p214
      %p216 = scmp.ne.s32.totalorder %s205, %s206
      %p217 = scmp.eq.s32.totalorder %s24, 0
      %p218 = por %p216, %p217
      %p219 = scmp.ne.s32.totalorder %s205, %s206
      %p220 = scmp.eq.s32.totalorder %s25, 1
      %p221 = por %p219, %p220
      %p223 = scmp.ne.s32.totalorder %s206, %s222
      %p224 = scmp.eq.s32.totalorder %s25, 0
      %p225 = por %p223, %p224
      %p226 = scmp.le.s32.totalorder 1, %s19
      %p227 = scmp.lt.s32.totalorder %s19, 3
      %p228 = pnand %p226, %p227
      %p229 = pneg %p228
      // Predicated region
      $region9: #{tpu_custom_call.1} parent=5 // pred_check
        _
      $region10: #{tpu_custom_call.1} parent=5 // pred_check_branch
        %231 = sbr.rel (%p228) target = $region12
      $region11: #{tpu_custom_call.1} parent=5 // pred_region
        %s232 = ssub.s32 %s19, 1
        // Predicated region
        $region13: #{tpu_custom_call.1} parent=11 // pred_check
          %p233 = pneg %p66
        $region14: #{tpu_custom_call.1} parent=11 // pred_check_branch
          %235 = sbr.rel (%p233) target = $region16
        $region15: #{tpu_custom_call.1} parent=11 // pred_region
          %s237 = ssub.s32 64, 64
          %238 = vsyncadd [#allocation3], %s237
          %s240 = sshll.u32 [#allocation2], 4
          %s241 = int_to_ptr.vmem [resolvable:$true] %s240
          %243 = dma.hbm_to_vmem [thread:$0]  %s1, 64, %s241, [#allocation3]
        $region16: #{tpu_custom_call.1} parent=11 // pred_fallthru
          _
        // Predicated region
        $region17: #{tpu_custom_call.1} parent=11 // pred_check
          %p244 = pneg %p87
        $region18: #{tpu_custom_call.1} parent=11 // pred_check_branch
          %246 = sbr.rel (%p244) target = $region20
        $region19: #{tpu_custom_call.1} parent=11 // pred_region
          _
        $region20: #{tpu_custom_call.1} parent=11 // pred_fallthru
          _
        // Predicated region
        $region21: #{tpu_custom_call.1} parent=11 // pred_check
          %p247 = pneg %p108
        $region22: #{tpu_custom_call.1} parent=11 // pred_check_branch
          %249 = sbr.rel (%p247) target = $region24
        $region23: #{tpu_custom_call.1} parent=11 // pred_region
          _
        $region24: #{tpu_custom_call.1} parent=11 // pred_fallthru
          _
        // Predicated region
        $region25: #{tpu_custom_call.1} parent=11 // pred_check
          %p250 = pneg %p129
        $region26: #{tpu_custom_call.1} parent=11 // pred_check_branch
          %252 = sbr.rel (%p250) target = $region28
        $region27: #{tpu_custom_call.1} parent=11 // pred_region
          %s254 = ssub.s32 64, 64
          %255 = vsyncadd [#allocation6], %s254
          %s257 = sshll.u32 [#allocation5], 4
          %s258 = int_to_ptr.vmem [resolvable:$true] %s257
          %260 = dma.hbm_to_vmem [thread:$0]  %s4, 64, %s258, [#allocation6]
        $region28: #{tpu_custom_call.1} parent=11 // pred_fallthru
          _
        // Predicated region
        $region29: #{tpu_custom_call.1} parent=11 // pred_check
          %p261 = pneg %p150
        $region30: #{tpu_custom_call.1} parent=11 // pred_check_branch
          %263 = sbr.rel (%p261) target = $region32
        $region31: #{tpu_custom_call.1} parent=11 // pred_region
          _
        $region32: #{tpu_custom_call.1} parent=11 // pred_fallthru
          _
        // Predicated region
        $region33: #{tpu_custom_call.1} parent=11 // pred_check
          %p264 = pneg %p171
        $region34: #{tpu_custom_call.1} parent=11 // pred_check_branch
          %266 = sbr.rel (%p264) target = $region36
        $region35: #{tpu_custom_call.1} parent=11 // pred_region
          _
        $region36: #{tpu_custom_call.1} parent=11 // pred_fallthru
          _
        // Predicated region
        $region37: #{tpu_custom_call.1} parent=11 // pred_check
          %p267 = pneg %p192
        $region38: #{tpu_custom_call.1} parent=11 // pred_check_branch
          %269 = sbr.rel (%p267) target = $region40
        $region39: #{tpu_custom_call.1} parent=11 // pred_region
          _
        $region40: #{tpu_custom_call.1} parent=11 // pred_fallthru
          _
      $region12: #{tpu_custom_call.1} parent=5 // pred_fallthru
        _
      %p270 = scmp.lt.s32.totalorder %s19, 2
      // Predicated region
      $region41: #{tpu_custom_call.1} parent=5 // pred_check
        %p271 = pneg %p270
      $region42: #{tpu_custom_call.1} parent=5 // pred_check_branch
        %273 = sbr.rel (%p271) target = $region44
      $region43: #{tpu_custom_call.1} parent=5 // pred_region
        // Predicated region
        $region45: #{tpu_custom_call.1} parent=43 // pred_check
          %p274 = pneg %p39
        $region46: #{tpu_custom_call.1} parent=43 // pred_check_branch
          %276 = sbr.rel (%p274) target = $region48
        $region47: #{tpu_custom_call.1} parent=43 // pred_region
          %p277 = scmp.lt.s32.totalorder %s19, 1
          %s278 = scalar_select %p277, %s19, 1
          %s279 = smul.addr %s278, 2
          %s280 = smul.addr %s279, 8
          %s281 = scalar_lea.vmem %s0, %s280
        $region48: #{tpu_custom_call.1} parent=43 // pred_fallthru
          _
      $region44: #{tpu_custom_call.1} parent=5 // pred_fallthru
        _
      %p282 = scmp.le.s32.totalorder 1, %s19
      %p283 = scmp.lt.s32.totalorder %s19, 3
      %p284 = pnand %p282, %p283
      %p285 = pneg %p284
      // Predicated region
      $region49: #{tpu_custom_call.1} parent=5 // pred_check
        _
      $region50: #{tpu_custom_call.1} parent=5 // pred_check_branch
        %287 = sbr.rel (%p284) target = $region52
      $region51: #{tpu_custom_call.1} parent=5 // pred_region
        %s288 = ssub.s32 %s19, 1
        // Predicated region
        $region53: #{tpu_custom_call.1} parent=51 // pred_check
          %p289 = pneg %p66
        $region54: #{tpu_custom_call.1} parent=51 // pred_check_branch
          %291 = sbr.rel (%p289) target = $region56
        $region55: #{tpu_custom_call.1} parent=51 // pred_region
          %292 = dma.done [#allocation3], 64
        $region56: #{tpu_custom_call.1} parent=51 // pred_fallthru
          _
        // Predicated region
        $region57: #{tpu_custom_call.1} parent=51 // pred_check
          %p293 = pneg %p129
        $region58: #{tpu_custom_call.1} parent=51 // pred_check_branch
          %295 = sbr.rel (%p293) target = $region60
        $region59: #{tpu_custom_call.1} parent=51 // pred_region
          %296 = dma.done [#allocation6], 64
        $region60: #{tpu_custom_call.1} parent=51 // pred_fallthru
          _
        %p297 = scmp.lt.s32.totalorder %s24, 1
        %s298 = scalar_select %p297, %s24, 1
        %s299 = smul.addr %s298, 2
        %s300 = smul.addr %s299, 8
        %s301 = scalar_lea.vmem %s0, %s300
        %p302 = pneg %p45
        %p303 = pneg %p42
        %p304 = pneg %p66
        %p305 = pneg %p63
        %p306 = pneg %p87
        %p307 = pneg %p84
        %p308 = pneg %p108
        %p309 = pneg %p105
        %p310 = pneg %p129
        %p311 = pneg %p126
        %p312 = pneg %p150
        %p313 = pneg %p147
        %p314 = pneg %p171
        %p315 = pneg %p168
        %p316 = pneg %p192
        %p317 = pneg %p189
        %p318 = pneg %p218
        %p319 = pneg %p215
        %s320 = sand.u32 %s205, 1
        %s321 = scalar_lea.sflag [#allocation4], %s320
        %s322 = sand.u32 %s205, 1
        %s323 = smul.addr %s322, 16
        %s324 = scalar_lea.vmem [#allocation7], %s323
        %p325 = scmp.lt.s32.totalorder %s24, 1
        %s326 = scalar_select %p325, %s24, 1
        %s327 = smul.addr %s326, 2
        %s328 = smul.addr %s327, 8
        %s329 = scalar_lea.vmem %s0, %s328
        %v331 = vld [vmem:[%s329] sm:$0xff]
        %v332 = vld [vmem:[%s329 + $0x8] sm:$0xff]
        %v333 = vld [vmem:[#allocation2] sm:$0xf]
        %334 = vrot.lane.b32.xlu0 %v331, 17
        %v335 = vpop.permute.xlu0 %334
        %336 = vrot.lane.b32.xlu0 %v332, 17
        %v337 = vpop.permute.xlu0 %336
        %v338 = vlaneseq
        %v339 = vand.u32 %v338, 127
        %vm340 = vcmp.lt.s32.totalorder %v339, 17
        %v341 = vsel %vm340, %v335, %v337
        %v342 = vsel %vm340, %v337, %v335
        %v343 = vld [vmem:[%s7] sm:$0x3]
        %v345 = vlaneseq
        %v346 = vshrl.u32 %v345, 7
        %v347 = vsub.s32 0, %v346
        %v348 = vrot.slane %v343, %v347
        %v349 = vlaneseq
        %v350 = vshrl.u32 %v349, 7
        %v351 = vsub.s32 1, %v350
        %v352 = vrot.slane %v343, %v351
        %v355 = vmul.f32 %v342, %v348
        %v356 = vmul.f32 %v341, %v352
        %357 = vrot.lane.b32.xlu0 %v331, 16
        %v358 = vpop.permute.xlu0 %357
        %359 = vrot.lane.b32.xlu0 %v332, 16
        %v360 = vpop.permute.xlu0 %359
        %vm361 = vcmp.lt.s32.totalorder %v339, 16
        %v362 = vsel %vm361, %v358, %v360
        %v363 = vsel %vm361, %v360, %v358
        %s364 = scalar_lea.vmem %s7, 2
        %v365 = vld [vmem:[%s364] sm:$0x3]
        %v367 = vlaneseq
        %v368 = vshrl.u32 %v367, 7
        %v369 = vsub.s32 0, %v368
        %v370 = vrot.slane %v365, %v369
        %v371 = vlaneseq
        %v372 = vshrl.u32 %v371, 7
        %v373 = vsub.s32 1, %v372
        %v374 = vrot.slane %v365, %v373
        %v377 = vmul.f32 %v363, %v370
        %v378 = vmul.f32 %v362, %v374
        %379 = vrot.lane.b32.xlu0 %v331, 15
        %v380 = vpop.permute.xlu0 %379
        %381 = vrot.lane.b32.xlu0 %v332, 15
        %v382 = vpop.permute.xlu0 %381
        %vm383 = vcmp.lt.s32.totalorder %v339, 15
        %v384 = vsel %vm383, %v380, %v382
        %v385 = vsel %vm383, %v382, %v380
        %s386 = scalar_lea.vmem %s7, 4
        %v387 = vld [vmem:[%s386] sm:$0x3]
        %v389 = vlaneseq
        %v390 = vshrl.u32 %v389, 7
        %v391 = vsub.s32 0, %v390
        %v392 = vrot.slane %v387, %v391
        %v393 = vlaneseq
        %v394 = vshrl.u32 %v393, 7
        %v395 = vsub.s32 1, %v394
        %v396 = vrot.slane %v387, %v395
        %v399 = vmul.f32 %v385, %v392
        %v400 = vmul.f32 %v384, %v396
        %401 = vrot.lane.b32.xlu0 %v331, 1
        %v402 = vpop.permute.xlu0 %401
        %403 = vrot.lane.b32.xlu0 %v332, 1
        %v404 = vpop.permute.xlu0 %403
        %vm405 = vcmp.lt.s32.totalorder %v339, 1
        %v406 = vsel %vm405, %v402, %v404
        %v407 = vsel %vm405, %v404, %v402
        %s408 = scalar_lea.vmem %s7, 6
        %v409 = vld [vmem:[%s408] sm:$0x3]
        %v411 = vlaneseq
        %v412 = vshrl.u32 %v411, 7
        %v413 = vsub.s32 0, %v412
        %v414 = vrot.slane %v409, %v413
        %v415 = vlaneseq
        %v416 = vshrl.u32 %v415, 7
        %v417 = vsub.s32 1, %v416
        %v418 = vrot.slane %v409, %v417
        %v421 = vmul.f32 %v407, %v414
        %v422 = vmul.f32 %v406, %v418
        %423 = vrot.lane.b32.xlu0 %v331, 127
        %v424 = vpop.permute.xlu0 %423
        %425 = vrot.lane.b32.xlu0 %v332, 127
        %v426 = vpop.permute.xlu0 %425
        %vm427 = vcmp.lt.s32.totalorder %v339, 127
        %v428 = vsel %vm427, %v424, %v426
        %v429 = vsel %vm427, %v426, %v424
        %s430 = scalar_lea.vmem %s7, 10
        %v431 = vld [vmem:[%s430] sm:$0x3]
        %v433 = vlaneseq
        %v434 = vshrl.u32 %v433, 7
        %v435 = vsub.s32 0, %v434
        %v436 = vrot.slane %v431, %v435
        %v437 = vlaneseq
        %v438 = vshrl.u32 %v437, 7
        %v439 = vsub.s32 1, %v438
        %v440 = vrot.slane %v431, %v439
        %v443 = vmul.f32 %v428, %v436
        %v444 = vmul.f32 %v429, %v440
        %445 = vrot.lane.b32.xlu0 %v331, 113
        %v446 = vpop.permute.xlu0 %445
        %447 = vrot.lane.b32.xlu0 %v332, 113
        %v448 = vpop.permute.xlu0 %447
        %vm449 = vcmp.lt.s32.totalorder %v339, 113
        %v450 = vsel %vm449, %v446, %v448
        %v451 = vsel %vm449, %v448, %v446
        %s452 = scalar_lea.vmem %s7, 12
        %v453 = vld [vmem:[%s452] sm:$0x3]
        %v455 = vlaneseq
        %v456 = vshrl.u32 %v455, 7
        %v457 = vsub.s32 0, %v456
        %v458 = vrot.slane %v453, %v457
        %v459 = vlaneseq
        %v460 = vshrl.u32 %v459, 7
        %v461 = vsub.s32 1, %v460
        %v462 = vrot.slane %v453, %v461
        %v465 = vmul.f32 %v450, %v458
        %v466 = vmul.f32 %v451, %v462
        %467 = vrot.lane.b32.xlu0 %v331, 112
        %v468 = vpop.permute.xlu0 %467
        %469 = vrot.lane.b32.xlu0 %v332, 112
        %v470 = vpop.permute.xlu0 %469
        %vm471 = vcmp.lt.s32.totalorder %v339, 112
        %v472 = vsel %vm471, %v468, %v470
        %v473 = vsel %vm471, %v470, %v468
        %s474 = scalar_lea.vmem %s7, 14
        %v475 = vld [vmem:[%s474] sm:$0x3]
        %v477 = vlaneseq
        %v478 = vshrl.u32 %v477, 7
        %v479 = vsub.s32 0, %v478
        %v480 = vrot.slane %v475, %v479
        %v481 = vlaneseq
        %v482 = vshrl.u32 %v481, 7
        %v483 = vsub.s32 1, %v482
        %v484 = vrot.slane %v475, %v483
        %v487 = vmul.f32 %v472, %v480
        %v488 = vmul.f32 %v473, %v484
        %489 = vrot.lane.b32.xlu0 %v331, 111
        %v490 = vpop.permute.xlu0 %489
        %491 = vrot.lane.b32.xlu0 %v332, 111
        %v492 = vpop.permute.xlu0 %491
        %vm493 = vcmp.lt.s32.totalorder %v339, 111
        %v494 = vsel %vm493, %v490, %v492
        %v495 = vsel %vm493, %v492, %v490
        %s496 = scalar_lea.vmem %s7, 16
        %v497 = vld [vmem:[%s496] sm:$0x3]
        %v499 = vlaneseq
        %v500 = vshrl.u32 %v499, 7
        %v501 = vsub.s32 0, %v500
        %v502 = vrot.slane %v497, %v501
        %v503 = vlaneseq
        %v504 = vshrl.u32 %v503, 7
        %v505 = vsub.s32 1, %v504
        %v506 = vrot.slane %v497, %v505
        %v509 = vmul.f32 %v494, %v502
        %v510 = vmul.f32 %v495, %v506
        %v511 = vpack.c.bf16 %v377, %v355
        %v512 = vpack.c.bf16 %v378, %v356
        %v513 = vpack.c.bf16 %v421, %v399
        %v514 = vpack.c.bf16 %v422, %v400
        %v515 = vpack.c.bf16 %v443, %v331
        %v516 = vpack.c.bf16 %v444, %v332
        %v517 = vpack.c.bf16 %v487, %v465
        %v518 = vpack.c.bf16 %v488, %v466
        %v519 = vpack.c.bf16 %v509, %v509
        %v520 = vpack.c.bf16 %v510, %v510
        %vm521 = vcmask 588800
        %v523 = vsel %vm521, %v333, 0
        %vm525 = vcmask 1043456
        %v527 = vsel %vm525, %v519, 0
        %v530 = vsel %vm525, %v520, 0
        %532 = vmatprep.subr.bf16.mxu0 %v512
        %533 = vmatpush1.bf16.msra.mxu0 %v511
        %534 = vmatprep.subr.bf16.mxu0 %v514
        %535 = vmatpush1.bf16.msra.mxu0 %v513
        %536 = vmatprep.subr.bf16.mxu0 %v516
        %537 = vmatpush1.bf16.msra.mxu0 %v515
        %538 = vmatprep.subr.bf16.mxu0 %v518
        %539 = vmatpush1.bf16.msra.mxu0 %v517
        %540 = vmatprep.subr.bf16.mxu0 %v530
        %541 = vmatpush1.bf16.msra.mxu0 %v527
        %542 = vmatprep.subr.bf16.mxu0 0
        %543 = vmatpush1.bf16.msra.mxu0 0
        %544 = vmatprep.subr.bf16.mxu0 0
        %545 = vmatpush1.bf16.msra.mxu0 0
        %546 = vmatprep.subr.bf16.mxu0 0
        %547 = vmatpush1.bf16.msra.mxu0 0
        %548 = vmatprep.subr.bf16.mxu0 0
        %549 = vmatpush1.bf16.msra.mxu0 0
        %550 = vmatprep.subr.bf16.mxu0 0
        %551 = vmatpush1.bf16.msra.mxu0 0
        %552 = vmatprep.subr.bf16.mxu0 0
        %553 = vmatpush1.bf16.msra.mxu0 0
        %554 = vmatprep.subr.bf16.mxu0 0
        %555 = vmatpush1.bf16.msra.mxu0 0
        %556 = vmatprep.subr.bf16.mxu0 0
        %557 = vmatpush1.bf16.msra.mxu0 0
        %558 = vmatprep.subr.bf16.mxu0 0
        %559 = vmatpush1.bf16.msra.mxu0 0
        %560 = vmatprep.subr.bf16.mxu0 0
        %561 = vmatpush1.bf16.msra.mxu0 0
        %562 = vmatprep.subr.bf16.mxu0 0
        %563 = vmatpush1.bf16.msra.mxu0 0
        %564 = vmatprep.mubr.bf16.mxu0 0
        %565 = vmatmul.mubr.bf16.gmra.mrb[0].mxu0 %v523
        %v566 = vpop.f32.mrb[0].mxu0
        %v567 = vadd.f32 0.0, %v566
        %v568 = vpop.f32.mrb[0].mxu0
        %v569 = vadd.f32 0.0, %v568
        %v570 = vpop.f32.mrb[0].mxu0
        %v571 = vpop.f32.mrb[0].mxu0
        %572 = vdwg.mxu0
        %v573 = vld [vmem:[%s2] sm:$0xff]
        %575 = vset.pattern.permute.xlu0 0
        %576 = vperm.xlu0 %575, %v573
        %v577 = vpop.permute.xlu0 %576
        %v579 = vmul.f32 %v567, %v577
        %v580 = vmul.f32 %v569, %v577
        %v581 = vld [vmem:[%s3] sm:$0xff]
        %583 = vset.pattern.permute.xlu0 0
        %584 = vperm.xlu0 %583, %v581
        %v585 = vpop.permute.xlu0 %584
        %v587 = vadd.f32 %v579, %v585
        %v588 = vadd.f32 %v580, %v585
        %vm589 = vcmp.gt.f32.partialorder %v587, 0.0
        %vm590 = vcmp.gt.f32.partialorder %v588, 0.0
        %v591 = vmul.f32 %v587, 0.2
        %v592 = vmul.f32 %v588, 0.2
        %v593 = vsel %vm589, %v587, %v591
        %v594 = vsel %vm590, %v588, %v592
        %v595 = vld [vmem:[#allocation5] sm:$0xf]
        %596 = vrot.lane.b32.xlu0 %v593, 17
        %v597 = vpop.permute.xlu0 %596
        %598 = vrot.lane.b32.xlu0 %v594, 17
        %v599 = vpop.permute.xlu0 %598
        %v600 = vsel %vm340, %v597, %v599
        %v601 = vsel %vm340, %v599, %v597
        %v602 = vmul.f32 %v601, %v348
        %v603 = vmul.f32 %v600, %v352
        %604 = vrot.lane.b32.xlu0 %v593, 16
        %v605 = vpop.permute.xlu0 %604
        %606 = vrot.lane.b32.xlu0 %v594, 16
        %v607 = vpop.permute.xlu0 %606
        %v608 = vsel %vm361, %v605, %v607
        %v609 = vsel %vm361, %v607, %v605
        %v610 = vmul.f32 %v609, %v370
        %v611 = vmul.f32 %v608, %v374
        %612 = vrot.lane.b32.xlu0 %v593, 15
        %v613 = vpop.permute.xlu0 %612
        %614 = vrot.lane.b32.xlu0 %v594, 15
        %v615 = vpop.permute.xlu0 %614
        %v616 = vsel %vm383, %v613, %v615
        %v617 = vsel %vm383, %v615, %v613
        %v618 = vmul.f32 %v617, %v392
        %v619 = vmul.f32 %v616, %v396
        %620 = vrot.lane.b32.xlu0 %v593, 1
        %v621 = vpop.permute.xlu0 %620
        %622 = vrot.lane.b32.xlu0 %v594, 1
        %v623 = vpop.permute.xlu0 %622
        %v624 = vsel %vm405, %v621, %v623
        %v625 = vsel %vm405, %v623, %v621
        %v626 = vmul.f32 %v625, %v414
        %v627 = vmul.f32 %v624, %v418
        %628 = vrot.lane.b32.xlu0 %v593, 127
        %v629 = vpop.permute.xlu0 %628
        %630 = vrot.lane.b32.xlu0 %v594, 127
        %v631 = vpop.permute.xlu0 %630
        %v632 = vsel %vm427, %v629, %v631
        %v633 = vsel %vm427, %v631, %v629
        %v634 = vmul.f32 %v632, %v436
        %v635 = vmul.f32 %v633, %v440
        %636 = vrot.lane.b32.xlu0 %v593, 113
        %v637 = vpop.permute.xlu0 %636
        %638 = vrot.lane.b32.xlu0 %v594, 113
        %v639 = vpop.permute.xlu0 %638
        %v640 = vsel %vm449, %v637, %v639
        %v641 = vsel %vm449, %v639, %v637
        %v642 = vmul.f32 %v640, %v458
        %v643 = vmul.f32 %v641, %v462
        %644 = vrot.lane.b32.xlu0 %v593, 112
        %v645 = vpop.permute.xlu0 %644
        %646 = vrot.lane.b32.xlu0 %v594, 112
        %v647 = vpop.permute.xlu0 %646
        %v648 = vsel %vm471, %v645, %v647
        %v649 = vsel %vm471, %v647, %v645
        %v650 = vmul.f32 %v648, %v480
        %v651 = vmul.f32 %v649, %v484
        %652 = vrot.lane.b32.xlu0 %v593, 111
        %v653 = vpop.permute.xlu0 %652
        %654 = vrot.lane.b32.xlu0 %v594, 111
        %v655 = vpop.permute.xlu0 %654
        %v656 = vsel %vm493, %v653, %v655
        %v657 = vsel %vm493, %v655, %v653
        %v658 = vmul.f32 %v656, %v502
        %v659 = vmul.f32 %v657, %v506
        %v660 = vpack.c.bf16 %v610, %v602
        %v661 = vpack.c.bf16 %v611, %v603
        %v662 = vpack.c.bf16 %v626, %v618
        %v663 = vpack.c.bf16 %v627, %v619
        %v664 = vpack.c.bf16 %v634, %v593
        %v665 = vpack.c.bf16 %v635, %v594
        %v666 = vpack.c.bf16 %v650, %v642
        %v667 = vpack.c.bf16 %v651, %v643
        %v668 = vpack.c.bf16 %v658, %v658
        %v669 = vpack.c.bf16 %v659, %v659
        %v671 = vsel %vm521, %v595, 0
        %v674 = vsel %vm525, %v668, 0
        %v677 = vsel %vm525, %v669, 0
        %679 = vmatprep.subr.bf16.mxu0 %v661
        %680 = vmatpush1.bf16.msra.mxu0 %v660
        %681 = vmatprep.subr.bf16.mxu0 %v663
        %682 = vmatpush1.bf16.msra.mxu0 %v662
        %683 = vmatprep.subr.bf16.mxu0 %v665
        %684 = vmatpush1.bf16.msra.mxu0 %v664
        %685 = vmatprep.subr.bf16.mxu0 %v667
        %686 = vmatpush1.bf16.msra.mxu0 %v666
        %687 = vmatprep.subr.bf16.mxu0 %v677
        %688 = vmatpush1.bf16.msra.mxu0 %v674
        %689 = vmatprep.subr.bf16.mxu0 0
        %690 = vmatpush1.bf16.msra.mxu0 0
        %691 = vmatprep.subr.bf16.mxu0 0
        %692 = vmatpush1.bf16.msra.mxu0 0
        %693 = vmatprep.subr.bf16.mxu0 0
        %694 = vmatpush1.bf16.msra.mxu0 0
        %695 = vmatprep.subr.bf16.mxu0 0
        %696 = vmatpush1.bf16.msra.mxu0 0
        %697 = vmatprep.subr.bf16.mxu0 0
        %698 = vmatpush1.bf16.msra.mxu0 0
        %699 = vmatprep.subr.bf16.mxu0 0
        %700 = vmatpush1.bf16.msra.mxu0 0
        %701 = vmatprep.subr.bf16.mxu0 0
        %702 = vmatpush1.bf16.msra.mxu0 0
        %703 = vmatprep.subr.bf16.mxu0 0
        %704 = vmatpush1.bf16.msra.mxu0 0
        %705 = vmatprep.subr.bf16.mxu0 0
        %706 = vmatpush1.bf16.msra.mxu0 0
        %707 = vmatprep.subr.bf16.mxu0 0
        %708 = vmatpush1.bf16.msra.mxu0 0
        %709 = vmatprep.subr.bf16.mxu0 0
        %710 = vmatpush1.bf16.msra.mxu0 0
        %711 = vmatprep.mubr.bf16.mxu0 0
        %712 = vmatmul.mubr.bf16.gmra.mrb[0].mxu0 %v671
        %v713 = vpop.f32.mrb[0].mxu0
        %v714 = vadd.f32 0.0, %v713
        %v715 = vpop.f32.mrb[0].mxu0
        %v716 = vadd.f32 0.0, %v715
        %v717 = vpop.f32.mrb[0].mxu0
        %v718 = vpop.f32.mrb[0].mxu0
        %719 = vdwg.mxu0
        %v720 = vld [vmem:[%s5] sm:$0xff]
        %722 = vset.pattern.permute.xlu0 0
        %723 = vperm.xlu0 %722, %v720
        %v724 = vpop.permute.xlu0 %723
        %v726 = vmul.f32 %v714, %v724
        %v727 = vmul.f32 %v716, %v724
        %v728 = vld [vmem:[%s6] sm:$0xff]
        %730 = vset.pattern.permute.xlu0 0
        %731 = vperm.xlu0 %730, %v728
        %v732 = vpop.permute.xlu0 %731
        %v734 = vadd.f32 %v726, %v732
        %v735 = vadd.f32 %v727, %v732
        %v736 = vadd.f32 %v734, %v331
        %v737 = vadd.f32 %v735, %v332
        %vm738 = vcmp.gt.f32.partialorder %v736, 0.0
        %vm739 = vcmp.gt.f32.partialorder %v737, 0.0
        %v740 = vmul.f32 %v736, 0.2
        %v741 = vmul.f32 %v737, 0.2
        %v742 = vsel %vm738, %v736, %v740
        %v743 = vsel %vm739, %v737, %v741
        %744 = vst [vmem:[%s324] sm:$0xff] %v742
        %745 = vst [vmem:[%s324 + $0x8] sm:$0xff] %v743
        %s746 = sand.u32 %s205, 1
        %s747 = scalar_lea.sflag [#allocation4], %s746
        %s748 = sand.u32 %s205, 1
        %s749 = smul.addr %s748, 16
        %s750 = scalar_lea.vmem [#allocation7], %s749
        // Predicated region
        $region61: #{tpu_custom_call.1} parent=51 // pred_check
          %p751 = pneg %p215
        $region62: #{tpu_custom_call.1} parent=51 // pred_check_branch
          %753 = sbr.rel (%p751) target = $region64
        $region63: #{tpu_custom_call.1} parent=51 // pred_region
          %s755 = ssub.s32 256, 256
          %756 = vsyncadd %s747, %s755
          %s757 = smul.addr %s24, 2
          %s758 = smul.addr %s757, 128
          %s759 = scalar_lea.hbm %s8, %s758
          %s761 = sshll.u32 %s750, 4
          %s762 = int_to_ptr.vmem [resolvable:$true] %s761
          %764 = dma.vmem_to_hbm [thread:$0]  %s762, 256, %s759, %s747
        $region64: #{tpu_custom_call.1} parent=51 // pred_fallthru
          _
      $region52: #{tpu_custom_call.1} parent=5 // pred_fallthru
        _
      %p765 = scmp.le.s32.totalorder 2, %s19
      // Predicated region
      $region65: #{tpu_custom_call.1} parent=5 // pred_check
        %p766 = pneg %p765
      $region66: #{tpu_custom_call.1} parent=5 // pred_check_branch
        %768 = sbr.rel (%p766) target = $region68
      $region67: #{tpu_custom_call.1} parent=5 // pred_region
        %s769 = ssub.s32 %s19, 2
        // Predicated region
        $region69: #{tpu_custom_call.1} parent=67 // pred_check
          %p770 = pneg %p221
        $region70: #{tpu_custom_call.1} parent=67 // pred_check_branch
          %772 = sbr.rel (%p770) target = $region72
        $region71: #{tpu_custom_call.1} parent=67 // pred_region
          %s773 = sand.u32 %s206, 1
          %s774 = scalar_lea.sflag [#allocation4], %s773
          %s775 = sand.u32 %s206, 1
          %s776 = smul.addr %s775, 16
          %s777 = scalar_lea.vmem [#allocation7], %s776
          %778 = dma.done %s774, 256
        $region72: #{tpu_custom_call.1} parent=67 // pred_fallthru
          _
      $region68: #{tpu_custom_call.1} parent=5 // pred_fallthru
        _
    $region6: #{tpu_custom_call.1} parent=1 // loop_footer
      %s23 = sadd.s32 1, %s19
    $region7: #{tpu_custom_call.1} parent=1 // loop_footer_branch
      %18 = sbr.rel target = $region3
    $region8: #{tpu_custom_call.1} parent=1 // loop_exit
      _
    %779 = vsyncpa [#allocation3], 1
    %s780 = scalar_lea.sflag [#allocation3], 1
    %781 = vsyncpa %s780, 1
    %782 = vsyncpa [#allocation6], 1
    %783 = vsyncpa [#allocation4], 1
    %s784 = scalar_lea.sflag [#allocation4], 1
    %785 = vsyncpa %s784, 1

</llo_original>
